<compile_context>
chip_gen: v6e
topology: v6e:2x2x1
jax: 0.10.0
libtpu: 0.0.40
codegen_flags: <defaults>
</compile_context>

<pallas_src>
import jax
import jax.numpy as jnp
from jax.experimental import pallas as pl
from jax.experimental.pallas import tpu as pltpu

EPS = 0.0001


def _rms_norm_wide_kernel(x_ref, g_ref, o_ref):
    """k == 1 path (d_model >= 128 or unpackable): reduce across lanes."""
    x = x_ref[...]
    xf = x.astype(jnp.float32)
    ms = jnp.mean(xf * xf, axis=-1, keepdims=True)               # (TR, 1) f32
    norm = jnp.sqrt(ms) + EPS
    scale = (norm * g_ref[...]).astype(x.dtype)                  # (TR, W)
    o_ref[...] = (x * scale).astype(o_ref.dtype)


def _rms_norm_packed_kernel(x_ref, g_ref, seg_ref, o_ref):
    """k > 1 path (d_model < 128): k rows packed per 128-lane row.

    Per-segment mean = x*x matmul'ed against a constant (128,128)
    block-diagonal (1/d) matrix: every lane ends up holding its segment mean,
    with no lane-splitting reshape and no cross-lane reduce.
    """
    x = x_ref[...]
    xf = x.astype(jnp.float32)
    ms = jnp.dot(xf * xf, seg_ref[...],
                 preferred_element_type=jnp.float32,
                 precision=jax.lax.Precision.HIGHEST)            # (TR, 128) f32
    norm = jnp.sqrt(ms) + EPS
    scale = (norm * g_ref[...]).astype(x.dtype)
    o_ref[...] = (x * scale).astype(o_ref.dtype)


def _vmem_capacity_bytes():
    try:
        return int(pltpu.get_tpu_info().vmem_capacity_bytes)
    except Exception:
        return 64 * 1024 * 1024   # conservative: v7x per-TensorCore VMEM


def _choose_row_tile(rows_p, width, itemsize, requested, vmem_cap):
    if requested is not None:
        rt = max(8, (int(requested) // 8) * 8)
    else:
        # Target >= ~2 MiB per input block so per-step overhead is negligible.
        target_bytes = 2 * 1024 * 1024
        rt = max(8, (target_bytes // (width * itemsize)) // 8 * 8)
    # Pipelined footprint (2x double-buffered in + 2x out + f32 temps) must
    # stay within ~half of physical VMEM.
    bytes_per_row = width * (4 * itemsize + 16)
    max_rows = max(8, ((vmem_cap // 2) // bytes_per_row) // 8 * 8)
    rt = min(rt, max_rows)
    # Keep >= 4 blocks when there is enough work: preserves DMA/compute
    # overlap and feeds both v7x TensorCores.
    if rows_p >= 32:
        rt = min(rt, max(8, ((rows_p // 4) // 8) * 8))
    if rt >= rows_p:
        rt = rows_p               # tiny input: single full-extent block
    return rt


def rms_norm(x, g, *, row_tile=None):
    """x: (..., d_model), g: (d_model,) -> same shape/dtype as x."""
    orig_shape = x.shape
    d_model = int(orig_shape[-1])
    rows = 1
    for s in orig_shape[:-1]:
        rows *= int(s)

    # Lane-dense packing: fold k rows into one 128-lane-wide row when possible.
    k = 128 // d_model if (d_model < 128 and 128 % d_model == 0) else 1
    width = k * d_model

    x2 = x.reshape(rows, d_model)
    rows_padded = rows
    if k > 1 and rows % k != 0:
        pad = k - rows % k
        x2 = jnp.concatenate([x2, jnp.zeros((pad, d_model), x.dtype)], axis=0)
        rows_padded = rows + pad
    rows_p = rows_padded // k
    x2d = x2.reshape(rows_p, width)

    # Gain pre-tiled to the full lane width (f32, tiny) so the kernel never
    # handles a sub-128-lane vreg or reshapes g.
    g_row = jnp.tile(g.astype(jnp.float32).reshape(1, d_model), (1, k))

    itemsize = x.dtype.itemsize
    vmem_cap = _vmem_capacity_bytes()
    rt = _choose_row_tile(rows_p, width, itemsize, row_tile, vmem_cap)
    grid = (pl.cdiv(rows_p, rt),)

    in_specs = [
        pl.BlockSpec((rt, width), lambda i: (i, 0)),
        pl.BlockSpec((1, width), lambda i: (0, 0)),
    ]
    args = [x2d, g_row]
    if k > 1:
        lane_seg = jnp.arange(width) // d_model
        seg_mat = (lane_seg[:, None] == lane_seg[None, :]).astype(jnp.float32)
        seg_mat = seg_mat / jnp.float32(d_model)                 # (128, 128)
        in_specs.append(pl.BlockSpec((width, width), lambda i: (0, 0)))
        args.append(seg_mat)
        kernel = _rms_norm_packed_kernel
    else:
        kernel = _rms_norm_wide_kernel

    seg_bytes = width * width * 4 if k > 1 else 0
    needed = rt * width * (4 * itemsize + 16) + seg_bytes + 4 * 1024 * 1024
    vmem_limit = int(min(vmem_cap * 3 // 4, max(32 * 1024 * 1024, needed)))

    out = pl.pallas_call(
        kernel,
        out_shape=jax.ShapeDtypeStruct((rows_p, width), x.dtype),
        grid_spec=pltpu.PrefetchScalarGridSpec(
            num_scalar_prefetch=0,
            grid=grid,
            in_specs=in_specs,
            out_specs=pl.BlockSpec((rt, width), lambda i: (i, 0)),
        ),
        compiler_params=pltpu.CompilerParams(
            dimension_semantics=("parallel",),
            vmem_limit_bytes=vmem_limit,
        ),
    )(*args)

    out = out.reshape(rows_padded, d_model)
    if rows_padded != rows:
        out = out[:rows]
    return out.reshape(orig_shape)


def _ref(x, g):
    xf = x.astype(jnp.float32)
    norm = jnp.sqrt(jnp.mean(xf * xf, axis=-1, keepdims=True)) + EPS
    return (xf * norm * g.astype(jnp.float32)).astype(x.dtype)


if __name__ == "__main__":
    key = jax.random.PRNGKey(0)

    # Shapes implied by the module: (batch, seq, d_model) with d_model = 32.
    batch, seq, d_model = 2, 8, 32
    x = jax.random.normal(key, (batch, seq, d_model), dtype=jnp.float32)
    g = jnp.ones((d_model,), dtype=jnp.float32)   # nn.Parameter(torch.ones(d_model))

    y = jax.block_until_ready(rms_norm(x, g))
    assert jnp.allclose(y, _ref(x, g), atol=1e-5, rtol=1e-5), "packed path mismatch"

    # Wide (k == 1) path with a ragged last row block.
    x2 = jax.random.normal(jax.random.PRNGKey(1), (20, 128), dtype=jnp.float32)
    g2 = jax.random.normal(jax.random.PRNGKey(2), (128,), dtype=jnp.float32)
    y2 = jax.block_until_ready(rms_norm(x2, g2, row_tile=8))
    assert jnp.allclose(y2, _ref(x2, g2), atol=1e-5, rtol=1e-5), "wide path mismatch"

    # Packed path with rows % k != 0 (wrapper pads instead of dropping packing).
    x3 = jax.random.normal(jax.random.PRNGKey(3), (3, 5, 32), dtype=jnp.float32)
    g3 = jax.random.normal(jax.random.PRNGKey(4), (32,), dtype=jnp.float32)
    y3 = jax.block_until_ready(rms_norm(x3, g3))
    assert jnp.allclose(y3, _ref(x3, g3), atol=1e-5, rtol=1e-5), "padded packed mismatch"

    # Packed path with multiple (ragged) grid blocks.
    x4 = jax.random.normal(jax.random.PRNGKey(5), (8, 100, 64), dtype=jnp.float32)
    g4 = jax.random.normal(jax.random.PRNGKey(6), (64,), dtype=jnp.float32)
    y4 = jax.block_until_ready(rms_norm(x4, g4, row_tile=96))
    assert jnp.allclose(y4, _ref(x4, g4), atol=1e-5, rtol=1e-5), "multi-block packed mismatch"

    print("KERNEL_OK")
</pallas_src>

<mosaic_0001>
module attributes {stable_mosaic.version = 11 : i64} {
  func.func @_rms_norm_packed_kernel(%arg0: i32, %arg1: memref<4x128xf32, #tpu.memory_space<vmem>>, %arg2: memref<1x128xf32, #tpu.memory_space<vmem>>, %arg3: memref<128x128xf32, #tpu.memory_space<vmem>>, %arg4: memref<4x128xf32, #tpu.memory_space<vmem>>) attributes {dimension_semantics = [#tpu.dimension_semantics<parallel>], iteration_bounds = array<i64: 1>, scalar_prefetch = 0 : i64, scratch_operands = 0 : i64, tpu.core_type = #tpu.core_type<tc>, window_params = [{transform_indices = @transform_0, window_bounds = array<i64: 4, 128>}, {pipeline_mode = #tpu.pipeline_mode<synchronous>, transform_indices = @transform_1, window_bounds = array<i64: 1, 128>}, {pipeline_mode = #tpu.pipeline_mode<synchronous>, transform_indices = @transform_2, window_bounds = array<i64: 128, 128>}, {transform_indices = @transform_3, window_bounds = array<i64: 4, 128>}]} {
    %c0 = arith.constant 0 : index
    %c0_0 = arith.constant 0 : index
    %0 = vector.load %arg1[%c0, %c0_0] : memref<4x128xf32, #tpu.memory_space<vmem>>, vector<4x128xf32>
    %1 = arith.mulf %0, %0 : vector<4x128xf32>
    %c0_1 = arith.constant 0 : index
    %c0_2 = arith.constant 0 : index
    %2 = vector.load %arg3[%c0_1, %c0_2] : memref<128x128xf32, #tpu.memory_space<vmem>>, vector<128x128xf32>
    %cst = arith.constant dense<0.000000e+00> : vector<4x128xf32>
    %3 = tpu.matmul %1, %2, %cst {dimension_numbers = #tpu.dot_dimension_numbers<[1], [0], [0], [1], [0, 0, 1, 1], [], []>, precision = #tpu.contract_precision<fp32>} : vector<4x128xf32>, vector<128x128xf32>, vector<4x128xf32> -> vector<4x128xf32>
    %4 = math.sqrt %3 : vector<4x128xf32>
    %cst_3 = arith.constant 9.99999974E-5 : f32
    %5 = vector.broadcast %cst_3 : f32 to vector<4x128xf32>
    %6 = arith.addf %4, %5 : vector<4x128xf32>
    %c0_4 = arith.constant 0 : index
    %c0_5 = arith.constant 0 : index
    %7 = vector.load %arg2[%c0_4, %c0_5] : memref<1x128xf32, #tpu.memory_space<vmem>>, vector<1x128xf32>
    %8 = vector.broadcast %7 : vector<1x128xf32> to vector<4x128xf32>
    %9 = arith.mulf %6, %8 : vector<4x128xf32>
    %10 = arith.mulf %0, %9 : vector<4x128xf32>
    %c0_6 = arith.constant 0 : index
    %c0_7 = arith.constant 0 : index
    %11 = vector.load %arg4[%c0_6, %c0_7] : memref<4x128xf32, #tpu.memory_space<vmem>>, vector<4x128xf32>
    tpu.vector_store %arg4[%c0_6, %c0_7], %10 {strides = array<i32>} : memref<4x128xf32, #tpu.memory_space<vmem>>, vector<4x128xf32>,
    return
  }
  func.func @transform_0(%arg0: i32) -> (i32, i32) {
    %c0_i32 = arith.constant 0 : i32
    %c0_i32_0 = arith.constant 0 : i32
    return %arg0, %c0_i32 : i32, i32
  }
  func.func @transform_1(%arg0: i32) -> (i32, i32) {
    %c0_i32 = arith.constant 0 : i32
    %c0_i32_0 = arith.constant 0 : i32
    %c0_i32_1 = arith.constant 0 : i32
    return %c0_i32, %c0_i32_0 : i32, i32
  }
  func.func @transform_2(%arg0: i32) -> (i32, i32) {
    %c0_i32 = arith.constant 0 : i32
    %c0_i32_0 = arith.constant 0 : i32
    %c0_i32_1 = arith.constant 0 : i32
    return %c0_i32, %c0_i32_0 : i32, i32
  }
  func.func @transform_3(%arg0: i32) -> (i32, i32) {
    %c0_i32 = arith.constant 0 : i32
    %c0_i32_0 = arith.constant 0 : i32
    return %arg0, %c0_i32 : i32, i32
  }
}

</mosaic_0001>

<llo_original>
// kernel: tpu_custom_call.1
$region0: #{tpu_custom_call.1}
  #allocation0 [shape = 'u32[]', space=smem, size = 0x4, offset = 0x4, fixed_abs, tag = 'smem constant byte address 0x4 - core index']
  #allocation1 [shape = 'u32[144,128]{1,0:T(1,128)}', space=vmem, size = 0x12000, scoped, tag = 'internal scratch']
  %s0 = inlined_call_operand.hbm [shape: f32[4,128], index: 0, kind: input, shape index: {}]
  %s1 = inlined_call_operand.vmem [shape: f32[1,128], index: 1, kind: input, shape index: {}]
  %s2 = inlined_call_operand.hbm [shape: f32[128,128], index: 2, kind: input, shape index: {}]
  %s3 = inlined_call_operand.hbm [shape: f32[4,128], index: 3, kind: output, shape index: {}]
  %s4 = sld [smem:[#allocation0]]
  $region30: #{tpu_custom_call.1} parent=0
    _
  %s6 = ssub.s32 1, %s4
  %s7 = scalar_select 0, %s6, %s4
  $region1: #{tpu_custom_call.1} parent=0
    #allocation2 [shape = 'u8[2048]{0}', space=vmem, size = 0x800, scoped, tag = 'input window, operand 0, single buffered']
    #allocation3 [shape = 's32[1]{0}', space=sflag, size = 0x4, scoped, tag = 'scoped memory for tpu_custom_call.1']
    #allocation4 [shape = 's32[1]{0}', space=sflag, size = 0x4, scoped, tag = 'scoped memory for tpu_custom_call.1']
    #allocation5 [shape = 'u8[65536]{0}', space=vmem, size = 0x10000, scoped, tag = 'input window, operand 2, single buffered']
    #allocation6 [shape = 's32[1]{0}', space=sflag, size = 0x4, scoped, tag = 'scoped memory for tpu_custom_call.1']
    #allocation7 [shape = 'u8[2048]{0}', space=vmem, size = 0x800, scoped, tag = 'output window, operand 0, single buffered']
    %8 = vsyncpa [#allocation3], 0
    %9 = vsyncpa [#allocation6], 0
    %10 = vsyncpa [#allocation4], 0
    // Predicated region
    $region2: #{tpu_custom_call.1} parent=1 // pred_check
      _
    $region3: #{tpu_custom_call.1} parent=1 // pred_check_branch
      %12 = sbr.rel (0) target = $region5
    $region4: #{tpu_custom_call.1} parent=1 // pred_region
      %s14 = ssub.s32 64, 64
      %15 = vsyncadd [#allocation3], %s14
      %s17 = sshll.u32 [#allocation2], 4
      %s18 = int_to_ptr.vmem [resolvable:$true] %s17
      %20 = dma.hbm_to_vmem [thread:$0]  %s0, 64, %s18, [#allocation3]
    $region5: #{tpu_custom_call.1} parent=1 // pred_fallthru
      _
    // Predicated region
    $region6: #{tpu_custom_call.1} parent=1 // pred_check
      _
    $region7: #{tpu_custom_call.1} parent=1 // pred_check_branch
      %22 = sbr.rel (0) target = $region9
    $region8: #{tpu_custom_call.1} parent=1 // pred_region
      _
    $region9: #{tpu_custom_call.1} parent=1 // pred_fallthru
      _
    // Predicated region
    $region10: #{tpu_custom_call.1} parent=1 // pred_check
      _
    $region11: #{tpu_custom_call.1} parent=1 // pred_check_branch
      %24 = sbr.rel (0) target = $region13
    $region12: #{tpu_custom_call.1} parent=1 // pred_region
      %s26 = ssub.s32 2048, 2048
      %27 = vsyncadd [#allocation6], %s26
      %s28 = sshll.u32 [#allocation5], 4
      %s29 = int_to_ptr.vmem [resolvable:$true] %s28
      %34 = dma.hbm_to_vmem [thread:$0]  %s2, 2048, %s29, [#allocation6], 128, 128, 8
    $region13: #{tpu_custom_call.1} parent=1 // pred_fallthru
      _
    // Predicated region
    $region14: #{tpu_custom_call.1} parent=1 // pred_check
      _
    $region15: #{tpu_custom_call.1} parent=1 // pred_check_branch
      %36 = sbr.rel (0) target = $region17
    $region16: #{tpu_custom_call.1} parent=1 // pred_region
      %37 = dma.done [#allocation3], 64
    $region17: #{tpu_custom_call.1} parent=1 // pred_fallthru
      _
    // Predicated region
    $region18: #{tpu_custom_call.1} parent=1 // pred_check
      _
    $region19: #{tpu_custom_call.1} parent=1 // pred_check_branch
      %39 = sbr.rel (0) target = $region21
    $region20: #{tpu_custom_call.1} parent=1 // pred_region
      %40 = dma.done [#allocation6], 2048
    $region21: #{tpu_custom_call.1} parent=1 // pred_fallthru
      _
    %v41 = vld [vmem:[#allocation2] sm:$0xf]
    %v42 = vmul.f32 %v41, %v41
    %v43 = vld [vmem:[#allocation5] sm:$0xff]
    %v44 = vld [vmem:[#allocation5 + $0x8] sm:$0xff]
    %v45 = vld [vmem:[#allocation5 + $0x10] sm:$0xff]
    %v46 = vld [vmem:[#allocation5 + $0x18] sm:$0xff]
    %v47 = vld [vmem:[#allocation5 + $0x20] sm:$0xff]
    %v48 = vld [vmem:[#allocation5 + $0x28] sm:$0xff]
    %v49 = vld [vmem:[#allocation5 + $0x30] sm:$0xff]
    %v50 = vld [vmem:[#allocation5 + $0x38] sm:$0xff]
    %v51 = vld [vmem:[#allocation5 + $0x40] sm:$0xff]
    %v52 = vld [vmem:[#allocation5 + $0x48] sm:$0xff]
    %v53 = vld [vmem:[#allocation5 + $0x50] sm:$0xff]
    %v54 = vld [vmem:[#allocation5 + $0x58] sm:$0xff]
    %v55 = vld [vmem:[#allocation5 + $0x60] sm:$0xff]
    %v56 = vld [vmem:[#allocation5 + $0x68] sm:$0xff]
    %v57 = vld [vmem:[#allocation5 + $0x70] sm:$0xff]
    %v58 = vld [vmem:[#allocation5 + $0x78] sm:$0xff]
    %59 = vmatprep.subr.mxu0 0.0
    %v60 = vand.u32 %v58, 4294901760
    %61 = vmatpush1.msra.mxu0 %v60
    %62 = vmatprep.subr.mxu0 0.0
    %v63 = vand.u32 %v57, 4294901760
    %64 = vmatpush1.msra.mxu0 %v63
    %65 = vmatprep.subr.mxu0 0.0
    %v66 = vand.u32 %v56, 4294901760
    %67 = vmatpush1.msra.mxu0 %v66
    %68 = vmatprep.subr.mxu0 0.0
    %v69 = vand.u32 %v55, 4294901760
    %70 = vmatpush1.msra.mxu0 %v69
    %71 = vmatprep.subr.mxu0 0.0
    %v72 = vand.u32 %v54, 4294901760
    %73 = vmatpush1.msra.mxu0 %v72
    %74 = vmatprep.subr.mxu0 0.0
    %v75 = vand.u32 %v53, 4294901760
    %76 = vmatpush1.msra.mxu0 %v75
    %77 = vmatprep.subr.mxu0 0.0
    %v78 = vand.u32 %v52, 4294901760
    %79 = vmatpush1.msra.mxu0 %v78
    %80 = vmatprep.subr.mxu0 0.0
    %v81 = vand.u32 %v51, 4294901760
    %82 = vmatpush1.msra.mxu0 %v81
    %83 = vmatprep.subr.mxu0 0.0
    %v84 = vand.u32 %v50, 4294901760
    %85 = vmatpush1.msra.mxu0 %v84
    %86 = vmatprep.subr.mxu0 0.0
    %v87 = vand.u32 %v49, 4294901760
    %88 = vmatpush1.msra.mxu0 %v87
    %89 = vmatprep.subr.mxu0 0.0
    %v90 = vand.u32 %v48, 4294901760
    %91 = vmatpush1.msra.mxu0 %v90
    %92 = vmatprep.subr.mxu0 0.0
    %v93 = vand.u32 %v47, 4294901760
    %94 = vmatpush1.msra.mxu0 %v93
    %95 = vmatprep.subr.mxu0 0.0
    %v96 = vand.u32 %v46, 4294901760
    %97 = vmatpush1.msra.mxu0 %v96
    %98 = vmatprep.subr.mxu0 0.0
    %v99 = vand.u32 %v45, 4294901760
    %100 = vmatpush1.msra.mxu0 %v99
    %101 = vmatprep.subr.mxu0 0.0
    %v102 = vand.u32 %v44, 4294901760
    %103 = vmatpush1.msra.mxu0 %v102
    %104 = vmatprep.subr.mxu0 0.0
    %v105 = vand.u32 %v43, 4294901760
    %106 = vmatpush1.msra.mxu0 %v105
    %107 = vmatprep.subr.mxu0 0.0
    %108 = vmatpush2.msra.mxu0 0.0
    %109 = vmatprep.subr.mxu0 0.0
    %110 = vmatpush2.msra.mxu0 0.0
    %111 = vmatprep.subr.mxu0 0.0
    %112 = vmatpush2.msra.mxu0 0.0
    %113 = vmatprep.subr.mxu0 0.0
    %114 = vmatpush2.msra.mxu0 0.0
    %115 = vmatprep.subr.mxu0 0.0
    %116 = vmatpush2.msra.mxu0 0.0
    %117 = vmatprep.subr.mxu0 0.0
    %118 = vmatpush2.msra.mxu0 0.0
    %119 = vmatprep.subr.mxu0 0.0
    %120 = vmatpush2.msra.mxu0 0.0
    %121 = vmatprep.subr.mxu0 0.0
    %122 = vmatpush2.msra.mxu0 0.0
    %123 = vmatprep.subr.mxu0 0.0
    %124 = vmatpush2.msra.mxu0 0.0
    %125 = vmatprep.subr.mxu0 0.0
    %126 = vmatpush2.msra.mxu0 0.0
    %127 = vmatprep.subr.mxu0 0.0
    %128 = vmatpush2.msra.mxu0 0.0
    %129 = vmatprep.subr.mxu0 0.0
    %130 = vmatpush2.msra.mxu0 0.0
    %131 = vmatprep.subr.mxu0 0.0
    %132 = vmatpush2.msra.mxu0 0.0
    %133 = vmatprep.subr.mxu0 0.0
    %134 = vmatpush2.msra.mxu0 0.0
    %135 = vmatprep.subr.mxu0 0.0
    %136 = vmatpush2.msra.mxu0 0.0
    %137 = vmatprep.subr.mxu0 0.0
    %138 = vmatpush2.msra.mxu0 0.0
    %139 = vmatprep.mubr.f32.mxu0 0.0
    %v140 = vand.u32 %v42, 4294901760
    %v141 = vsub.f32 %v42, %v140
    %v142 = vand.u32 %v141, 4294901760
    %v143 = vsub.f32 %v141, %v142
    %v144 = vand.u32 %v143, 4294901760
    %145 = vmatmul.mubr.f32.gmra.mxu0 %v144
    %v146 = vpop.f32.mrf.mxu0
    %v147 = vadd.f32 0.0, %v146
    %v148 = vpop.f32.mrf.mxu0
    %149 = vdwg.mxu0
    %150 = vmatprep.subr.mxu0 0.0
    %v151 = vand.u32 %v58, 4294901760
    %v152 = vsub.f32 %v58, %v151
    %v153 = vand.u32 %v152, 4294901760
    %v154 = vsub.f32 %v152, %v153
    %v155 = vand.u32 %v154, 4294901760
    %156 = vmatpush1.msra.mxu0 %v155
    %157 = vmatprep.subr.mxu0 0.0
    %v158 = vand.u32 %v57, 4294901760
    %v159 = vsub.f32 %v57, %v158
    %v160 = vand.u32 %v159, 4294901760
    %v161 = vsub.f32 %v159, %v160
    %v162 = vand.u32 %v161, 4294901760
    %163 = vmatpush1.msra.mxu0 %v162
    %164 = vmatprep.subr.mxu0 0.0
    %v165 = vand.u32 %v56, 4294901760
    %v166 = vsub.f32 %v56, %v165
    %v167 = vand.u32 %v166, 4294901760
    %v168 = vsub.f32 %v166, %v167
    %v169 = vand.u32 %v168, 4294901760
    %170 = vmatpush1.msra.mxu0 %v169
    %171 = vmatprep.subr.mxu0 0.0
    %v172 = vand.u32 %v55, 4294901760
    %v173 = vsub.f32 %v55, %v172
    %v174 = vand.u32 %v173, 4294901760
    %v175 = vsub.f32 %v173, %v174
    %v176 = vand.u32 %v175, 4294901760
    %177 = vmatpush1.msra.mxu0 %v176
    %178 = vmatprep.subr.mxu0 0.0
    %v179 = vand.u32 %v54, 4294901760
    %v180 = vsub.f32 %v54, %v179
    %v181 = vand.u32 %v180, 4294901760
    %v182 = vsub.f32 %v180, %v181
    %v183 = vand.u32 %v182, 4294901760
    %184 = vmatpush1.msra.mxu0 %v183
    %185 = vmatprep.subr.mxu0 0.0
    %v186 = vand.u32 %v53, 4294901760
    %v187 = vsub.f32 %v53, %v186
    %v188 = vand.u32 %v187, 4294901760
    %v189 = vsub.f32 %v187, %v188
    %v190 = vand.u32 %v189, 4294901760
    %191 = vmatpush1.msra.mxu0 %v190
    %192 = vmatprep.subr.mxu0 0.0
    %v193 = vand.u32 %v52, 4294901760
    %v194 = vsub.f32 %v52, %v193
    %v195 = vand.u32 %v194, 4294901760
    %v196 = vsub.f32 %v194, %v195
    %v197 = vand.u32 %v196, 4294901760
    %198 = vmatpush1.msra.mxu0 %v197
    %199 = vmatprep.subr.mxu0 0.0
    %v200 = vand.u32 %v51, 4294901760
    %v201 = vsub.f32 %v51, %v200
    %v202 = vand.u32 %v201, 4294901760
    %v203 = vsub.f32 %v201, %v202
    %v204 = vand.u32 %v203, 4294901760
    %205 = vmatpush1.msra.mxu0 %v204
    %206 = vmatprep.subr.mxu0 0.0
    %v207 = vand.u32 %v50, 4294901760
    %v208 = vsub.f32 %v50, %v207
    %v209 = vand.u32 %v208, 4294901760
    %v210 = vsub.f32 %v208, %v209
    %v211 = vand.u32 %v210, 4294901760
    %212 = vmatpush1.msra.mxu0 %v211
    %213 = vmatprep.subr.mxu0 0.0
    %v214 = vand.u32 %v49, 4294901760
    %v215 = vsub.f32 %v49, %v214
    %v216 = vand.u32 %v215, 4294901760
    %v217 = vsub.f32 %v215, %v216
    %v218 = vand.u32 %v217, 4294901760
    %219 = vmatpush1.msra.mxu0 %v218
    %220 = vmatprep.subr.mxu0 0.0
    %v221 = vand.u32 %v48, 4294901760
    %v222 = vsub.f32 %v48, %v221
    %v223 = vand.u32 %v222, 4294901760
    %v224 = vsub.f32 %v222, %v223
    %v225 = vand.u32 %v224, 4294901760
    %226 = vmatpush1.msra.mxu0 %v225
    %227 = vmatprep.subr.mxu0 0.0
    %v228 = vand.u32 %v47, 4294901760
    %v229 = vsub.f32 %v47, %v228
    %v230 = vand.u32 %v229, 4294901760
    %v231 = vsub.f32 %v229, %v230
    %v232 = vand.u32 %v231, 4294901760
    %233 = vmatpush1.msra.mxu0 %v232
    %234 = vmatprep.subr.mxu0 0.0
    %v235 = vand.u32 %v46, 4294901760
    %v236 = vsub.f32 %v46, %v235
    %v237 = vand.u32 %v236, 4294901760
    %v238 = vsub.f32 %v236, %v237
    %v239 = vand.u32 %v238, 4294901760
    %240 = vmatpush1.msra.mxu0 %v239
    %241 = vmatprep.subr.mxu0 0.0
    %v242 = vand.u32 %v45, 4294901760
    %v243 = vsub.f32 %v45, %v242
    %v244 = vand.u32 %v243, 4294901760
    %v245 = vsub.f32 %v243, %v244
    %v246 = vand.u32 %v245, 4294901760
    %247 = vmatpush1.msra.mxu0 %v246
    %248 = vmatprep.subr.mxu0 0.0
    %v249 = vand.u32 %v44, 4294901760
    %v250 = vsub.f32 %v44, %v249
    %v251 = vand.u32 %v250, 4294901760
    %v252 = vsub.f32 %v250, %v251
    %v253 = vand.u32 %v252, 4294901760
    %254 = vmatpush1.msra.mxu0 %v253
    %255 = vmatprep.subr.mxu0 0.0
    %v256 = vand.u32 %v43, 4294901760
    %v257 = vsub.f32 %v43, %v256
    %v258 = vand.u32 %v257, 4294901760
    %v259 = vsub.f32 %v257, %v258
    %v260 = vand.u32 %v259, 4294901760
    %261 = vmatpush1.msra.mxu0 %v260
    %262 = vmatprep.subr.mxu0 0.0
    %263 = vmatpush2.msra.mxu0 0.0
    %264 = vmatprep.subr.mxu0 0.0
    %265 = vmatpush2.msra.mxu0 0.0
    %266 = vmatprep.subr.mxu0 0.0
    %267 = vmatpush2.msra.mxu0 0.0
    %268 = vmatprep.subr.mxu0 0.0
    %269 = vmatpush2.msra.mxu0 0.0
    %270 = vmatprep.subr.mxu0 0.0
    %271 = vmatpush2.msra.mxu0 0.0
    %272 = vmatprep.subr.mxu0 0.0
    %273 = vmatpush2.msra.mxu0 0.0
    %274 = vmatprep.subr.mxu0 0.0
    %275 = vmatpush2.msra.mxu0 0.0
    %276 = vmatprep.subr.mxu0 0.0
    %277 = vmatpush2.msra.mxu0 0.0
    %278 = vmatprep.subr.mxu0 0.0
    %279 = vmatpush2.msra.mxu0 0.0
    %280 = vmatprep.subr.mxu0 0.0
    %281 = vmatpush2.msra.mxu0 0.0
    %282 = vmatprep.subr.mxu0 0.0
    %283 = vmatpush2.msra.mxu0 0.0
    %284 = vmatprep.subr.mxu0 0.0
    %285 = vmatpush2.msra.mxu0 0.0
    %286 = vmatprep.subr.mxu0 0.0
    %287 = vmatpush2.msra.mxu0 0.0
    %288 = vmatprep.subr.mxu0 0.0
    %289 = vmatpush2.msra.mxu0 0.0
    %290 = vmatprep.subr.mxu0 0.0
    %291 = vmatpush2.msra.mxu0 0.0
    %292 = vmatprep.subr.mxu0 0.0
    %293 = vmatpush2.msra.mxu0 0.0
    %294 = vmatprep.mubr.f32.mxu0 0.0
    %v295 = vand.u32 %v42, 4294901760
    %296 = vmatmul.mubr.f32.gmra.mxu0 %v295
    %v297 = vpop.f32.mrf.mxu0
    %v298 = vadd.f32 %v147, %v297
    %v299 = vpop.f32.mrf.mxu0
    %300 = vdwg.mxu0
    %301 = vmatprep.subr.mxu0 0.0
    %v302 = vand.u32 %v58, 4294901760
    %v303 = vsub.f32 %v58, %v302
    %304 = vmatpush1.msra.mxu0 %v303
    %305 = vmatprep.subr.mxu0 0.0
    %v306 = vand.u32 %v57, 4294901760
    %v307 = vsub.f32 %v57, %v306
    %308 = vmatpush1.msra.mxu0 %v307
    %309 = vmatprep.subr.mxu0 0.0
    %v310 = vand.u32 %v56, 4294901760
    %v311 = vsub.f32 %v56, %v310
    %312 = vmatpush1.msra.mxu0 %v311
    %313 = vmatprep.subr.mxu0 0.0
    %v314 = vand.u32 %v55, 4294901760
    %v315 = vsub.f32 %v55, %v314
    %316 = vmatpush1.msra.mxu0 %v315
    %317 = vmatprep.subr.mxu0 0.0
    %v318 = vand.u32 %v54, 4294901760
    %v319 = vsub.f32 %v54, %v318
    %320 = vmatpush1.msra.mxu0 %v319
    %321 = vmatprep.subr.mxu0 0.0
    %v322 = vand.u32 %v53, 4294901760
    %v323 = vsub.f32 %v53, %v322
    %324 = vmatpush1.msra.mxu0 %v323
    %325 = vmatprep.subr.mxu0 0.0
    %v326 = vand.u32 %v52, 4294901760
    %v327 = vsub.f32 %v52, %v326
    %328 = vmatpush1.msra.mxu0 %v327
    %329 = vmatprep.subr.mxu0 0.0
    %v330 = vand.u32 %v51, 4294901760
    %v331 = vsub.f32 %v51, %v330
    %332 = vmatpush1.msra.mxu0 %v331
    %333 = vmatprep.subr.mxu0 0.0
    %v334 = vand.u32 %v50, 4294901760
    %v335 = vsub.f32 %v50, %v334
    %336 = vmatpush1.msra.mxu0 %v335
    %337 = vmatprep.subr.mxu0 0.0
    %v338 = vand.u32 %v49, 4294901760
    %v339 = vsub.f32 %v49, %v338
    %340 = vmatpush1.msra.mxu0 %v339
    %341 = vmatprep.subr.mxu0 0.0
    %v342 = vand.u32 %v48, 4294901760
    %v343 = vsub.f32 %v48, %v342
    %344 = vmatpush1.msra.mxu0 %v343
    %345 = vmatprep.subr.mxu0 0.0
    %v346 = vand.u32 %v47, 4294901760
    %v347 = vsub.f32 %v47, %v346
    %348 = vmatpush1.msra.mxu0 %v347
    %349 = vmatprep.subr.mxu0 0.0
    %v350 = vand.u32 %v46, 4294901760
    %v351 = vsub.f32 %v46, %v350
    %352 = vmatpush1.msra.mxu0 %v351
    %353 = vmatprep.subr.mxu0 0.0
    %v354 = vand.u32 %v45, 4294901760
    %v355 = vsub.f32 %v45, %v354
    %356 = vmatpush1.msra.mxu0 %v355
    %357 = vmatprep.subr.mxu0 0.0
    %v358 = vand.u32 %v44, 4294901760
    %v359 = vsub.f32 %v44, %v358
    %360 = vmatpush1.msra.mxu0 %v359
    %361 = vmatprep.subr.mxu0 0.0
    %v362 = vand.u32 %v43, 4294901760
    %v363 = vsub.f32 %v43, %v362
    %364 = vmatpush1.msra.mxu0 %v363
    %365 = vmatprep.subr.mxu0 0.0
    %366 = vmatpush2.msra.mxu0 0.0
    %367 = vmatprep.subr.mxu0 0.0
    %368 = vmatpush2.msra.mxu0 0.0
    %369 = vmatprep.subr.mxu0 0.0
    %370 = vmatpush2.msra.mxu0 0.0
    %371 = vmatprep.subr.mxu0 0.0
    %372 = vmatpush2.msra.mxu0 0.0
    %373 = vmatprep.subr.mxu0 0.0
    %374 = vmatpush2.msra.mxu0 0.0
    %375 = vmatprep.subr.mxu0 0.0
    %376 = vmatpush2.msra.mxu0 0.0
    %377 = vmatprep.subr.mxu0 0.0
    %378 = vmatpush2.msra.mxu0 0.0
    %379 = vmatprep.subr.mxu0 0.0
    %380 = vmatpush2.msra.mxu0 0.0
    %381 = vmatprep.subr.mxu0 0.0
    %382 = vmatpush2.msra.mxu0 0.0
    %383 = vmatprep.subr.mxu0 0.0
    %384 = vmatpush2.msra.mxu0 0.0
    %385 = vmatprep.subr.mxu0 0.0
    %386 = vmatpush2.msra.mxu0 0.0
    %387 = vmatprep.subr.mxu0 0.0
    %388 = vmatpush2.msra.mxu0 0.0
    %389 = vmatprep.subr.mxu0 0.0
    %390 = vmatpush2.msra.mxu0 0.0
    %391 = vmatprep.subr.mxu0 0.0
    %392 = vmatpush2.msra.mxu0 0.0
    %393 = vmatprep.subr.mxu0 0.0
    %394 = vmatpush2.msra.mxu0 0.0
    %395 = vmatprep.subr.mxu0 0.0
    %396 = vmatpush2.msra.mxu0 0.0
    %397 = vmatprep.mubr.f32.mxu0 0.0
    %v398 = vand.u32 %v42, 4294901760
    %v399 = vsub.f32 %v42, %v398
    %400 = vmatmul.mubr.f32.gmra.mxu0 %v399
    %v401 = vpop.f32.mrf.mxu0
    %v402 = vadd.f32 %v298, %v401
    %v403 = vpop.f32.mrf.mxu0
    %404 = vdwg.mxu0
    %405 = vmatprep.subr.mxu0 0.0
    %v406 = vand.u32 %v58, 4294901760
    %407 = vmatpush1.msra.mxu0 %v406
    %408 = vmatprep.subr.mxu0 0.0
    %v409 = vand.u32 %v57, 4294901760
    %410 = vmatpush1.msra.mxu0 %v409
    %411 = vmatprep.subr.mxu0 0.0
    %v412 = vand.u32 %v56, 4294901760
    %413 = vmatpush1.msra.mxu0 %v412
    %414 = vmatprep.subr.mxu0 0.0
    %v415 = vand.u32 %v55, 4294901760
    %416 = vmatpush1.msra.mxu0 %v415
    %417 = vmatprep.subr.mxu0 0.0
    %v418 = vand.u32 %v54, 4294901760
    %419 = vmatpush1.msra.mxu0 %v418
    %420 = vmatprep.subr.mxu0 0.0
    %v421 = vand.u32 %v53, 4294901760
    %422 = vmatpush1.msra.mxu0 %v421
    %423 = vmatprep.subr.mxu0 0.0
    %v424 = vand.u32 %v52, 4294901760
    %425 = vmatpush1.msra.mxu0 %v424
    %426 = vmatprep.subr.mxu0 0.0
    %v427 = vand.u32 %v51, 4294901760
    %428 = vmatpush1.msra.mxu0 %v427
    %429 = vmatprep.subr.mxu0 0.0
    %v430 = vand.u32 %v50, 4294901760
    %431 = vmatpush1.msra.mxu0 %v430
    %432 = vmatprep.subr.mxu0 0.0
    %v433 = vand.u32 %v49, 4294901760
    %434 = vmatpush1.msra.mxu0 %v433
    %435 = vmatprep.subr.mxu0 0.0
    %v436 = vand.u32 %v48, 4294901760
    %437 = vmatpush1.msra.mxu0 %v436
    %438 = vmatprep.subr.mxu0 0.0
    %v439 = vand.u32 %v47, 4294901760
    %440 = vmatpush1.msra.mxu0 %v439
    %441 = vmatprep.subr.mxu0 0.0
    %v442 = vand.u32 %v46, 4294901760
    %443 = vmatpush1.msra.mxu0 %v442
    %444 = vmatprep.subr.mxu0 0.0
    %v445 = vand.u32 %v45, 4294901760
    %446 = vmatpush1.msra.mxu0 %v445
    %447 = vmatprep.subr.mxu0 0.0
    %v448 = vand.u32 %v44, 4294901760
    %449 = vmatpush1.msra.mxu0 %v448
    %450 = vmatprep.subr.mxu0 0.0
    %v451 = vand.u32 %v43, 4294901760
    %452 = vmatpush1.msra.mxu0 %v451
    %453 = vmatprep.subr.mxu0 0.0
    %454 = vmatpush2.msra.mxu0 0.0
    %455 = vmatprep.subr.mxu0 0.0
    %456 = vmatpush2.msra.mxu0 0.0
    %457 = vmatprep.subr.mxu0 0.0
    %458 = vmatpush2.msra.mxu0 0.0
    %459 = vmatprep.subr.mxu0 0.0
    %460 = vmatpush2.msra.mxu0 0.0
    %461 = vmatprep.subr.mxu0 0.0
    %462 = vmatpush2.msra.mxu0 0.0
    %463 = vmatprep.subr.mxu0 0.0
    %464 = vmatpush2.msra.mxu0 0.0
    %465 = vmatprep.subr.mxu0 0.0
    %466 = vmatpush2.msra.mxu0 0.0
    %467 = vmatprep.subr.mxu0 0.0
    %468 = vmatpush2.msra.mxu0 0.0
    %469 = vmatprep.subr.mxu0 0.0
    %470 = vmatpush2.msra.mxu0 0.0
    %471 = vmatprep.subr.mxu0 0.0
    %472 = vmatpush2.msra.mxu0 0.0
    %473 = vmatprep.subr.mxu0 0.0
    %474 = vmatpush2.msra.mxu0 0.0
    %475 = vmatprep.subr.mxu0 0.0
    %476 = vmatpush2.msra.mxu0 0.0
    %477 = vmatprep.subr.mxu0 0.0
    %478 = vmatpush2.msra.mxu0 0.0
    %479 = vmatprep.subr.mxu0 0.0
    %480 = vmatpush2.msra.mxu0 0.0
    %481 = vmatprep.subr.mxu0 0.0
    %482 = vmatpush2.msra.mxu0 0.0
    %483 = vmatprep.subr.mxu0 0.0
    %484 = vmatpush2.msra.mxu0 0.0
    %485 = vmatprep.mubr.f32.mxu0 0.0
    %v486 = vand.u32 %v42, 4294901760
    %v487 = vsub.f32 %v42, %v486
    %v488 = vand.u32 %v487, 4294901760
    %489 = vmatmul.mubr.f32.gmra.mxu0 %v488
    %v490 = vpop.f32.mrf.mxu0
    %v491 = vadd.f32 %v402, %v490
    %v492 = vpop.f32.mrf.mxu0
    %493 = vdwg.mxu0
    %494 = vmatprep.subr.mxu0 0.0
    %v495 = vand.u32 %v58, 4294901760
    %v496 = vsub.f32 %v58, %v495
    %v497 = vand.u32 %v496, 4294901760
    %498 = vmatpush1.msra.mxu0 %v497
    %499 = vmatprep.subr.mxu0 0.0
    %v500 = vand.u32 %v57, 4294901760
    %v501 = vsub.f32 %v57, %v500
    %v502 = vand.u32 %v501, 4294901760
    %503 = vmatpush1.msra.mxu0 %v502
    %504 = vmatprep.subr.mxu0 0.0
    %v505 = vand.u32 %v56, 4294901760
    %v506 = vsub.f32 %v56, %v505
    %v507 = vand.u32 %v506, 4294901760
    %508 = vmatpush1.msra.mxu0 %v507
    %509 = vmatprep.subr.mxu0 0.0
    %v510 = vand.u32 %v55, 4294901760
    %v511 = vsub.f32 %v55, %v510
    %v512 = vand.u32 %v511, 4294901760
    %513 = vmatpush1.msra.mxu0 %v512
    %514 = vmatprep.subr.mxu0 0.0
    %v515 = vand.u32 %v54, 4294901760
    %v516 = vsub.f32 %v54, %v515
    %v517 = vand.u32 %v516, 4294901760
    %518 = vmatpush1.msra.mxu0 %v517
    %519 = vmatprep.subr.mxu0 0.0
    %v520 = vand.u32 %v53, 4294901760
    %v521 = vsub.f32 %v53, %v520
    %v522 = vand.u32 %v521, 4294901760
    %523 = vmatpush1.msra.mxu0 %v522
    %524 = vmatprep.subr.mxu0 0.0
    %v525 = vand.u32 %v52, 4294901760
    %v526 = vsub.f32 %v52, %v525
    %v527 = vand.u32 %v526, 4294901760
    %528 = vmatpush1.msra.mxu0 %v527
    %529 = vmatprep.subr.mxu0 0.0
    %v530 = vand.u32 %v51, 4294901760
    %v531 = vsub.f32 %v51, %v530
    %v532 = vand.u32 %v531, 4294901760
    %533 = vmatpush1.msra.mxu0 %v532
    %534 = vmatprep.subr.mxu0 0.0
    %v535 = vand.u32 %v50, 4294901760
    %v536 = vsub.f32 %v50, %v535
    %v537 = vand.u32 %v536, 4294901760
    %538 = vmatpush1.msra.mxu0 %v537
    %539 = vmatprep.subr.mxu0 0.0
    %v540 = vand.u32 %v49, 4294901760
    %v541 = vsub.f32 %v49, %v540
    %v542 = vand.u32 %v541, 4294901760
    %543 = vmatpush1.msra.mxu0 %v542
    %544 = vmatprep.subr.mxu0 0.0
    %v545 = vand.u32 %v48, 4294901760
    %v546 = vsub.f32 %v48, %v545
    %v547 = vand.u32 %v546, 4294901760
    %548 = vmatpush1.msra.mxu0 %v547
    %549 = vmatprep.subr.mxu0 0.0
    %v550 = vand.u32 %v47, 4294901760
    %v551 = vsub.f32 %v47, %v550
    %v552 = vand.u32 %v551, 4294901760
    %553 = vmatpush1.msra.mxu0 %v552
    %554 = vmatprep.subr.mxu0 0.0
    %v555 = vand.u32 %v46, 4294901760
    %v556 = vsub.f32 %v46, %v555
    %v557 = vand.u32 %v556, 4294901760
    %558 = vmatpush1.msra.mxu0 %v557
    %559 = vmatprep.subr.mxu0 0.0
    %v560 = vand.u32 %v45, 4294901760
    %v561 = vsub.f32 %v45, %v560
    %v562 = vand.u32 %v561, 4294901760
    %563 = vmatpush1.msra.mxu0 %v562
    %564 = vmatprep.subr.mxu0 0.0
    %v565 = vand.u32 %v44, 4294901760
    %v566 = vsub.f32 %v44, %v565
    %v567 = vand.u32 %v566, 4294901760
    %568 = vmatpush1.msra.mxu0 %v567
    %569 = vmatprep.subr.mxu0 0.0
    %v570 = vand.u32 %v43, 4294901760
    %v571 = vsub.f32 %v43, %v570
    %v572 = vand.u32 %v571, 4294901760
    %573 = vmatpush1.msra.mxu0 %v572
    %574 = vmatprep.subr.mxu0 0.0
    %575 = vmatpush2.msra.mxu0 0.0
    %576 = vmatprep.subr.mxu0 0.0
    %577 = vmatpush2.msra.mxu0 0.0
    %578 = vmatprep.subr.mxu0 0.0
    %579 = vmatpush2.msra.mxu0 0.0
    %580 = vmatprep.subr.mxu0 0.0
    %581 = vmatpush2.msra.mxu0 0.0
    %582 = vmatprep.subr.mxu0 0.0
    %583 = vmatpush2.msra.mxu0 0.0
    %584 = vmatprep.subr.mxu0 0.0
    %585 = vmatpush2.msra.mxu0 0.0
    %586 = vmatprep.subr.mxu0 0.0
    %587 = vmatpush2.msra.mxu0 0.0
    %588 = vmatprep.subr.mxu0 0.0
    %589 = vmatpush2.msra.mxu0 0.0
    %590 = vmatprep.subr.mxu0 0.0
    %591 = vmatpush2.msra.mxu0 0.0
    %592 = vmatprep.subr.mxu0 0.0
    %593 = vmatpush2.msra.mxu0 0.0
    %594 = vmatprep.subr.mxu0 0.0
    %595 = vmatpush2.msra.mxu0 0.0
    %596 = vmatprep.subr.mxu0 0.0
    %597 = vmatpush2.msra.mxu0 0.0
    %598 = vmatprep.subr.mxu0 0.0
    %599 = vmatpush2.msra.mxu0 0.0
    %600 = vmatprep.subr.mxu0 0.0
    %601 = vmatpush2.msra.mxu0 0.0
    %602 = vmatprep.subr.mxu0 0.0
    %603 = vmatpush2.msra.mxu0 0.0
    %604 = vmatprep.subr.mxu0 0.0
    %605 = vmatpush2.msra.mxu0 0.0
    %606 = vmatprep.mubr.f32.mxu0 0.0
    %v607 = vand.u32 %v42, 4294901760
    %608 = vmatmul.mubr.f32.gmra.mxu0 %v607
    %v609 = vpop.f32.mrf.mxu0
    %v610 = vadd.f32 %v491, %v609
    %v611 = vpop.f32.mrf.mxu0
    %612 = vdwg.mxu0
    %613 = vmatprep.subr.mxu0 0.0
    %v614 = vand.u32 %v58, 4294901760
    %615 = vmatpush1.msra.mxu0 %v614
    %616 = vmatprep.subr.mxu0 0.0
    %v617 = vand.u32 %v57, 4294901760
    %618 = vmatpush1.msra.mxu0 %v617
    %619 = vmatprep.subr.mxu0 0.0
    %v620 = vand.u32 %v56, 4294901760
    %621 = vmatpush1.msra.mxu0 %v620
    %622 = vmatprep.subr.mxu0 0.0
    %v623 = vand.u32 %v55, 4294901760
    %624 = vmatpush1.msra.mxu0 %v623
    %625 = vmatprep.subr.mxu0 0.0
    %v626 = vand.u32 %v54, 4294901760
    %627 = vmatpush1.msra.mxu0 %v626
    %628 = vmatprep.subr.mxu0 0.0
    %v629 = vand.u32 %v53, 4294901760
    %630 = vmatpush1.msra.mxu0 %v629
    %631 = vmatprep.subr.mxu0 0.0
    %v632 = vand.u32 %v52, 4294901760
    %633 = vmatpush1.msra.mxu0 %v632
    %634 = vmatprep.subr.mxu0 0.0
    %v635 = vand.u32 %v51, 4294901760
    %636 = vmatpush1.msra.mxu0 %v635
    %637 = vmatprep.subr.mxu0 0.0
    %v638 = vand.u32 %v50, 4294901760
    %639 = vmatpush1.msra.mxu0 %v638
    %640 = vmatprep.subr.mxu0 0.0
    %v641 = vand.u32 %v49, 4294901760
    %642 = vmatpush1.msra.mxu0 %v641
    %643 = vmatprep.subr.mxu0 0.0
    %v644 = vand.u32 %v48, 4294901760
    %645 = vmatpush1.msra.mxu0 %v644
    %646 = vmatprep.subr.mxu0 0.0
    %v647 = vand.u32 %v47, 4294901760
    %648 = vmatpush1.msra.mxu0 %v647
    %649 = vmatprep.subr.mxu0 0.0
    %v650 = vand.u32 %v46, 4294901760
    %651 = vmatpush1.msra.mxu0 %v650
    %652 = vmatprep.subr.mxu0 0.0
    %v653 = vand.u32 %v45, 4294901760
    %654 = vmatpush1.msra.mxu0 %v653
    %655 = vmatprep.subr.mxu0 0.0
    %v656 = vand.u32 %v44, 4294901760
    %657 = vmatpush1.msra.mxu0 %v656
    %658 = vmatprep.subr.mxu0 0.0
    %v659 = vand.u32 %v43, 4294901760
    %660 = vmatpush1.msra.mxu0 %v659
    %661 = vmatprep.subr.mxu0 0.0
    %662 = vmatpush2.msra.mxu0 0.0
    %663 = vmatprep.subr.mxu0 0.0
    %664 = vmatpush2.msra.mxu0 0.0
    %665 = vmatprep.subr.mxu0 0.0
    %666 = vmatpush2.msra.mxu0 0.0
    %667 = vmatprep.subr.mxu0 0.0
    %668 = vmatpush2.msra.mxu0 0.0
    %669 = vmatprep.subr.mxu0 0.0
    %670 = vmatpush2.msra.mxu0 0.0
    %671 = vmatprep.subr.mxu0 0.0
    %672 = vmatpush2.msra.mxu0 0.0
    %673 = vmatprep.subr.mxu0 0.0
    %674 = vmatpush2.msra.mxu0 0.0
    %675 = vmatprep.subr.mxu0 0.0
    %676 = vmatpush2.msra.mxu0 0.0
    %677 = vmatprep.subr.mxu0 0.0
    %678 = vmatpush2.msra.mxu0 0.0
    %679 = vmatprep.subr.mxu0 0.0
    %680 = vmatpush2.msra.mxu0 0.0
    %681 = vmatprep.subr.mxu0 0.0
    %682 = vmatpush2.msra.mxu0 0.0
    %683 = vmatprep.subr.mxu0 0.0
    %684 = vmatpush2.msra.mxu0 0.0
    %685 = vmatprep.subr.mxu0 0.0
    %686 = vmatpush2.msra.mxu0 0.0
    %687 = vmatprep.subr.mxu0 0.0
    %688 = vmatpush2.msra.mxu0 0.0
    %689 = vmatprep.subr.mxu0 0.0
    %690 = vmatpush2.msra.mxu0 0.0
    %691 = vmatprep.subr.mxu0 0.0
    %692 = vmatpush2.msra.mxu0 0.0
    %693 = vmatprep.mubr.f32.mxu0 0.0
    %v694 = vand.u32 %v42, 4294901760
    %695 = vmatmul.mubr.f32.gmra.mxu0 %v694
    %v696 = vpop.f32.mrf.mxu0
    %v697 = vadd.f32 %v610, %v696
    %v698 = vpop.f32.mrf.mxu0
    %699 = vdwg.mxu0
    %v700 = vrsqrt.pop %v697
    %v701 = vmul.f32 %v697, %v700
    %vm702 = vcmp.eq.f32.partialorder %v697, inf
    %v703 = vsel %vm702, %v697, %v701
    %vm704 = vcmp.eq.f32.partialorder %v697, 0.0
    %v705 = vand.u32 %v697, 2147483648
    %v706 = vsel %vm704, %v705, %v703
    %v707 = vadd.f32 %v706, 0.0001
    %v708 = vld [vmem:[%s1] sm:$0x1]
    %v710 = vlaneseq
    %v711 = vshrl.u32 %v710, 7
    %v712 = vsub.s32 0, %v711
    %v713 = vrot.slane %v708, %v712
    %v715 = vmul.f32 %v707, %v713
    %v716 = vmul.f32 %v41, %v715
    %717 = vst [vmem:[#allocation7] sm:$0xf] %v716
    // Predicated region
    $region22: #{tpu_custom_call.1} parent=1 // pred_check
      _
    $region23: #{tpu_custom_call.1} parent=1 // pred_check_branch
      %719 = sbr.rel (0) target = $region25
    $region24: #{tpu_custom_call.1} parent=1 // pred_region
      %s721 = ssub.s32 64, 64
      %722 = vsyncadd [#allocation4], %s721
      %s724 = sshll.u32 [#allocation7], 4
      %s725 = int_to_ptr.vmem [resolvable:$true] %s724
      %727 = dma.vmem_to_hbm [thread:$0]  %s725, 64, %s3, [#allocation4]
    $region25: #{tpu_custom_call.1} parent=1 // pred_fallthru
      _
    // Predicated region
    $region26: #{tpu_custom_call.1} parent=1 // pred_check
      _
    $region27: #{tpu_custom_call.1} parent=1 // pred_check_branch
      %729 = sbr.rel (0) target = $region29
    $region28: #{tpu_custom_call.1} parent=1 // pred_region
      %730 = dma.done [#allocation4], 64
    $region29: #{tpu_custom_call.1} parent=1 // pred_fallthru
      _
    %731 = vsyncpa [#allocation3], 1
    %732 = vsyncpa [#allocation6], 1
    %733 = vsyncpa [#allocation4], 1

</llo_original>
